<compile_context>
chip_gen: v5e
topology: v5e:2x2
jax: 0.10.0
libtpu: 0.0.40
codegen_flags: <defaults>
</compile_context>

<pallas_src>
import jax
import jax.numpy as jnp
from jax.experimental import pallas as pl
from jax.experimental.pallas import tpu as pltpu


_SELU_ALPHA = 1.6732632423543772
_SELU_SCALE = 1.0507009873554805
_BN_EPS = 1e-5


# ----------------------------- Kernel 1 ------------------------------------
def _stats_kernel(x_ref, w1_ref, h_ref, sum_ref, sumsq_ref, sum_acc, sumsq_acc):
    @pl.when(pl.program_id(0) == 0)
    def _init():
        sum_acc[...] = jnp.zeros_like(sum_acc)
        sumsq_acc[...] = jnp.zeros_like(sumsq_acc)

    # linear1.bias is intentionally omitted: training-mode BatchNorm subtracts
    # the batch mean immediately afterwards, so a per-feature constant bias
    # cannot affect the forward output (and the zero-padded rows then
    # contribute exactly 0 to the statistics, so no masking is required).
    h = jnp.dot(x_ref[...], w1_ref[...], preferred_element_type=jnp.float32)
    h_ref[...] = h

    sum_acc[...] += jnp.sum(h, axis=0, keepdims=True)
    sumsq_acc[...] += jnp.sum(h * h, axis=0, keepdims=True)

    # Constant-index output blocks stay VMEM-resident across the grid; only
    # the final value reaches HBM.
    sum_ref[...] = sum_acc[...]
    sumsq_ref[...] = sumsq_acc[...]


# ----------------------------- Kernel 2 ------------------------------------
def _head_kernel(h_ref, scale_ref, shift_ref, w2_ref, b2_ref, o_ref):
    hn = h_ref[...] * scale_ref[...] + shift_ref[...]          # folded BatchNorm
    s = _SELU_SCALE * jnp.where(hn > 0, hn, _SELU_ALPHA * (jnp.exp(hn) - 1.0))
    z = jnp.dot(s, w2_ref[...], preferred_element_type=jnp.float32) + b2_ref[...]
    m = jnp.max(z, axis=-1, keepdims=True)
    e = jnp.exp(z - m)
    o_ref[...] = e / jnp.sum(e, axis=-1, keepdims=True)        # exact softmax


# ------------------------------ Wrapper ------------------------------------
def ailever_forward(x, w1, w2, b2, gamma, beta, *,
                    tb=1024, compute_dtype=jnp.bfloat16):
    B, D = x.shape
    H = w1.shape[1]
    O = w2.shape[1]

    itemsize = jnp.dtype(compute_dtype).itemsize
    gran = {4: 8, 2: 16, 1: 32}.get(itemsize, 8)        # sublane packing granule
    rup = lambda a, m: ((a + m - 1) // m) * m
    tb = rup(max(gran, min(int(tb), rup(B, gran))), gran)
    Bp = rup(B, tb)
    ntiles = Bp // tb

    xs = jnp.pad(x, ((0, Bp - B), (0, 0))).astype(compute_dtype)
    w1s = w1.astype(compute_dtype)

    lane = 128  # (*, 28) / (*, 10) blocks lane-pad to 128 in VMEM
    vmem_need = (2 * tb * D * itemsize          # double-buffered x tile
                 + 2 * D * lane * itemsize      # w1 (lane-padded)
                 + 4 * tb * lane * 4            # h / y blocks, double-buffered
                 + (2 << 20))                   # headroom
    vmem_limit = int(min(max(vmem_need, 32 << 20), 64 << 20))

    # --- Kernel 1: stream x once, spill h to HBM, accumulate BN stats ------
    h, hsum, hsumsq = pl.pallas_call(
        _stats_kernel,
        out_shape=(jax.ShapeDtypeStruct((Bp, H), jnp.float32),
                   jax.ShapeDtypeStruct((1, H), jnp.float32),
                   jax.ShapeDtypeStruct((1, H), jnp.float32)),
        grid=(ntiles,),
        in_specs=[pl.BlockSpec((tb, D), lambda i: (i, 0)),
                  pl.BlockSpec((D, H), lambda i: (0, 0))],
        out_specs=(pl.BlockSpec((tb, H), lambda i: (i, 0)),
                   pl.BlockSpec((1, H), lambda i: (0, 0)),
                   pl.BlockSpec((1, H), lambda i: (0, 0))),
        scratch_shapes=[pltpu.VMEM((1, H), jnp.float32),
                        pltpu.VMEM((1, H), jnp.float32)],
        compiler_params=pltpu.CompilerParams(
            dimension_semantics=("arbitrary",),   # stats accumulate across tiles
            vmem_limit_bytes=vmem_limit),
    )(xs, w1s)
    # TODO(synk): on v7x, split this batch axis across the 2 TensorCores
    # (per-core partial sum/sumsq combined via CMEM + core_barrier) to use both
    # HBM paths; v5e/v6e have a single TensorCore so it does not apply there.

    # --- BatchNorm finalize, done once on (1, H) arrays ---------------------
    inv_n = 1.0 / B                                        # TRUE batch size
    mean = hsum * inv_n
    var = jnp.maximum(hsumsq * inv_n - mean * mean, 0.0)   # biased var (training BN)
    scale = (gamma * jax.lax.rsqrt(var + _BN_EPS)).astype(jnp.float32)
    shift = (beta - mean * scale).astype(jnp.float32)

    # --- Kernel 2: BN apply + SELU + Linear2 + softmax ----------------------
    y = pl.pallas_call(
        _head_kernel,
        out_shape=jax.ShapeDtypeStruct((Bp, O), jnp.float32),
        grid=(ntiles,),
        in_specs=[pl.BlockSpec((tb, H), lambda i: (i, 0)),
                  pl.BlockSpec((1, H), lambda i: (0, 0)),
                  pl.BlockSpec((1, H), lambda i: (0, 0)),
                  pl.BlockSpec((H, O), lambda i: (0, 0)),
                  pl.BlockSpec((1, O), lambda i: (0, 0))],
        out_specs=pl.BlockSpec((tb, O), lambda i: (i, 0)),
        compiler_params=pltpu.CompilerParams(
            dimension_semantics=("parallel",),
            vmem_limit_bytes=vmem_limit),
    )(h, scale, shift, w2.astype(jnp.float32), b2.astype(jnp.float32))

    return y[:B]


# ------------------------------ Params / reference -------------------------
def init_params(key):
    k1, k2, k4 = jax.random.split(key, 3)
    in1, out1 = 28 * 28, 28
    in2, out2 = 28, 10
    # xavier_normal_(gain=1.0): std = sqrt(2 / (fan_in + fan_out))
    std1 = (2.0 / (in1 + out1)) ** 0.5
    std2 = (2.0 / (in2 + out2)) ** 0.5
    w1 = jax.random.normal(k1, (in1, out1), jnp.float32) * std1
    w2 = jax.random.normal(k2, (in2, out2), jnp.float32) * std2
    # linear1.bias ~ N(1, 1) exists in the PyTorch module but is an exact
    # no-op on the forward output under training-mode BatchNorm, so it is not
    # materialized here.
    bound2 = 1.0 / (in2 ** 0.5)   # default nn.Linear bias init for linear2
    b2 = jax.random.uniform(k4, (1, out2), jnp.float32, -bound2, bound2)
    gamma = jnp.ones((1, out1), jnp.float32)
    beta = jnp.zeros((1, out1), jnp.float32)
    return w1, w2, b2, gamma, beta


def reference_forward(x, w1, w2, b2, gamma, beta, compute_dtype=jnp.float32):
    """Pure-JAX reference of the PyTorch forward (training-mode BN)."""
    h = jnp.dot(x.astype(compute_dtype), w1.astype(compute_dtype),
                preferred_element_type=jnp.float32)
    mean = jnp.mean(h, axis=0, keepdims=True)
    var = jnp.mean((h - mean) ** 2, axis=0, keepdims=True)
    hn = (h - mean) * jax.lax.rsqrt(var + _BN_EPS) * gamma + beta
    s = _SELU_SCALE * jnp.where(hn > 0, hn, _SELU_ALPHA * jnp.expm1(hn))
    z = s @ w2 + b2
    return jax.nn.softmax(z, axis=-1)


if __name__ == "__main__":
    key = jax.random.PRNGKey(0)
    kx, kp = jax.random.split(key)

    B = 20   # deliberately NOT a multiple of the tile -> exercises padding
    x = jax.random.normal(kx, (B, 28 * 28), jnp.float32)
    params = init_params(kp)

    # 1) Full-f32 compute path, tiny tile -> 3 grid steps (exercises the
    #    cross-tile statistics accumulation); compare tightly vs f32 ref.
    y32 = jax.block_until_ready(
        ailever_forward(x, *params, tb=8, compute_dtype=jnp.float32))
    ref32 = reference_forward(x, *params, compute_dtype=jnp.float32)
    assert y32.shape == (B, 10)
    assert jnp.allclose(jnp.sum(y32, axis=-1), 1.0, atol=1e-3)
    assert jnp.allclose(y32, ref32, atol=1e-3, rtol=1e-3)

    # 2) Default fast path: bf16 x/W1 stream (halves the dominant HBM read),
    #    compared against a reference that uses the same bf16 first matmul.
    y16 = jax.block_until_ready(
        ailever_forward(x, *params, tb=16, compute_dtype=jnp.bfloat16))
    ref16 = reference_forward(x, *params, compute_dtype=jnp.bfloat16)
    assert y16.shape == (B, 10)
    assert jnp.allclose(jnp.sum(y16, axis=-1), 1.0, atol=1e-3)
    assert jnp.allclose(y16, ref16, atol=2e-3, rtol=2e-3)

    print("KERNEL_OK")
</pallas_src>

<mosaic_0001>
module attributes {stable_mosaic.version = 11 : i64} {
  func.func @_stats_kernel(%arg0: i32, %arg1: memref<8x784xf32, #tpu.memory_space<vmem>>, %arg2: memref<784x28xf32, #tpu.memory_space<vmem>>, %arg3: memref<8x28xf32, #tpu.memory_space<vmem>>, %arg4: memref<1x28xf32, #tpu.memory_space<vmem>>, %arg5: memref<1x28xf32, #tpu.memory_space<vmem>>, %arg6: memref<1x28xf32, #tpu.memory_space<vmem>>, %arg7: memref<1x28xf32, #tpu.memory_space<vmem>>) attributes {dimension_semantics = [#tpu.dimension_semantics<arbitrary>], iteration_bounds = array<i64: 3>, scalar_prefetch = 0 : i64, scratch_operands = 2 : i64, tpu.core_type = #tpu.core_type<tc>, window_params = [{transform_indices = @transform_0, window_bounds = array<i64: 8, 784>}, {pipeline_mode = #tpu.pipeline_mode<synchronous>, transform_indices = @transform_1, window_bounds = array<i64: 784, 28>}, {transform_indices = @transform_2, window_bounds = array<i64: 8, 28>}, {pipeline_mode = #tpu.pipeline_mode<synchronous>, transform_indices = @transform_3, window_bounds = array<i64: 1, 28>}, {pipeline_mode = #tpu.pipeline_mode<synchronous>, transform_indices = @transform_4, window_bounds = array<i64: 1, 28>}]} {
    %c0_i32 = arith.constant 0 : i32
    %0 = arith.cmpi eq, %arg0, %c0_i32 : i32
    %1 = arith.extui %0 : i1 to i32
    %c0_i32_0 = arith.constant 0 : i32
    %2 = arith.cmpi ne, %1, %c0_i32_0 : i32
    scf.if %2 {
      %cst_24 = arith.constant 0.000000e+00 : f32
      %22 = vector.broadcast %cst_24 : f32 to vector<1x28xf32>
      %c0_25 = arith.constant 0 : index
      %c0_26 = arith.constant 0 : index
      %23 = vector.load %arg6[%c0_25, %c0_26] : memref<1x28xf32, #tpu.memory_space<vmem>>, vector<1x28xf32>
      tpu.vector_store %arg6[%c0_25, %c0_26], %22 {strides = array<i32>} : memref<1x28xf32, #tpu.memory_space<vmem>>, vector<1x28xf32>,
      %cst_27 = arith.constant 0.000000e+00 : f32
      %24 = vector.broadcast %cst_27 : f32 to vector<1x28xf32>
      %c0_28 = arith.constant 0 : index
      %c0_29 = arith.constant 0 : index
      %25 = vector.load %arg7[%c0_28, %c0_29] : memref<1x28xf32, #tpu.memory_space<vmem>>, vector<1x28xf32>
      tpu.vector_store %arg7[%c0_28, %c0_29], %24 {strides = array<i32>} : memref<1x28xf32, #tpu.memory_space<vmem>>, vector<1x28xf32>,
    } else {
    }
    %c0 = arith.constant 0 : index
    %c0_1 = arith.constant 0 : index
    %3 = vector.load %arg1[%c0, %c0_1] : memref<8x784xf32, #tpu.memory_space<vmem>>, vector<8x784xf32>
    %c0_2 = arith.constant 0 : index
    %c0_3 = arith.constant 0 : index
    %4 = vector.load %arg2[%c0_2, %c0_3] : memref<784x28xf32, #tpu.memory_space<vmem>>, vector<784x28xf32>
    %cst = arith.constant dense<0.000000e+00> : vector<8x28xf32>
    %5 = tpu.matmul %3, %4, %cst {dimension_numbers = #tpu.dot_dimension_numbers<[1], [0], [0], [1], [0, 0, 1, 1], [], []>} : vector<8x784xf32>, vector<784x28xf32>, vector<8x28xf32> -> vector<8x28xf32>
    %c0_4 = arith.constant 0 : index
    %c0_5 = arith.constant 0 : index
    %6 = vector.load %arg3[%c0_4, %c0_5] : memref<8x28xf32, #tpu.memory_space<vmem>>, vector<8x28xf32>
    tpu.vector_store %arg3[%c0_4, %c0_5], %5 {strides = array<i32>} : memref<8x28xf32, #tpu.memory_space<vmem>>, vector<8x28xf32>,
    %c0_6 = arith.constant 0 : index
    %c0_7 = arith.constant 0 : index
    %7 = vector.load %arg6[%c0_6, %c0_7] : memref<1x28xf32, #tpu.memory_space<vmem>>, vector<1x28xf32>
    %cst_8 = arith.constant dense<0.000000e+00> : vector<28xf32>
    %8 = vector.multi_reduction <add>, %5, %cst_8 [0] : vector<8x28xf32> to vector<28xf32>
    %9 = vector.shape_cast %8 : vector<28xf32> to vector<1x28xf32>
    %10 = arith.addf %7, %9 : vector<1x28xf32>
    %c0_9 = arith.constant 0 : index
    %c0_10 = arith.constant 0 : index
    %11 = vector.load %arg6[%c0_9, %c0_10] : memref<1x28xf32, #tpu.memory_space<vmem>>, vector<1x28xf32>
    tpu.vector_store %arg6[%c0_9, %c0_10], %10 {strides = array<i32>} : memref<1x28xf32, #tpu.memory_space<vmem>>, vector<1x28xf32>,
    %c0_11 = arith.constant 0 : index
    %c0_12 = arith.constant 0 : index
    %12 = vector.load %arg7[%c0_11, %c0_12] : memref<1x28xf32, #tpu.memory_space<vmem>>, vector<1x28xf32>
    %13 = arith.mulf %5, %5 : vector<8x28xf32>
    %cst_13 = arith.constant dense<0.000000e+00> : vector<28xf32>
    %14 = vector.multi_reduction <add>, %13, %cst_13 [0] : vector<8x28xf32> to vector<28xf32>
    %15 = vector.shape_cast %14 : vector<28xf32> to vector<1x28xf32>
    %16 = arith.addf %12, %15 : vector<1x28xf32>
    %c0_14 = arith.constant 0 : index
    %c0_15 = arith.constant 0 : index
    %17 = vector.load %arg7[%c0_14, %c0_15] : memref<1x28xf32, #tpu.memory_space<vmem>>, vector<1x28xf32>
    tpu.vector_store %arg7[%c0_14, %c0_15], %16 {strides = array<i32>} : memref<1x28xf32, #tpu.memory_space<vmem>>, vector<1x28xf32>,
    %c0_16 = arith.constant 0 : index
    %c0_17 = arith.constant 0 : index
    %18 = vector.load %arg6[%c0_16, %c0_17] : memref<1x28xf32, #tpu.memory_space<vmem>>, vector<1x28xf32>
    %c0_18 = arith.constant 0 : index
    %c0_19 = arith.constant 0 : index
    %19 = vector.load %arg4[%c0_18, %c0_19] : memref<1x28xf32, #tpu.memory_space<vmem>>, vector<1x28xf32>
    tpu.vector_store %arg4[%c0_18, %c0_19], %18 {strides = array<i32>} : memref<1x28xf32, #tpu.memory_space<vmem>>, vector<1x28xf32>,
    %c0_20 = arith.constant 0 : index
    %c0_21 = arith.constant 0 : index
    %20 = vector.load %arg7[%c0_20, %c0_21] : memref<1x28xf32, #tpu.memory_space<vmem>>, vector<1x28xf32>
    %c0_22 = arith.constant 0 : index
    %c0_23 = arith.constant 0 : index
    %21 = vector.load %arg5[%c0_22, %c0_23] : memref<1x28xf32, #tpu.memory_space<vmem>>, vector<1x28xf32>
    tpu.vector_store %arg5[%c0_22, %c0_23], %20 {strides = array<i32>} : memref<1x28xf32, #tpu.memory_space<vmem>>, vector<1x28xf32>,
    return
  }
  func.func @transform_0(%arg0: i32) -> (i32, i32) {
    %c0_i32 = arith.constant 0 : i32
    %c0_i32_0 = arith.constant 0 : i32
    return %arg0, %c0_i32 : i32, i32
  }
  func.func @transform_1(%arg0: i32) -> (i32, i32) {
    %c0_i32 = arith.constant 0 : i32
    %c0_i32_0 = arith.constant 0 : i32
    %c0_i32_1 = arith.constant 0 : i32
    return %c0_i32, %c0_i32_0 : i32, i32
  }
  func.func @transform_2(%arg0: i32) -> (i32, i32) {
    %c0_i32 = arith.constant 0 : i32
    %c0_i32_0 = arith.constant 0 : i32
    return %arg0, %c0_i32 : i32, i32
  }
  func.func @transform_3(%arg0: i32) -> (i32, i32) {
    %c0_i32 = arith.constant 0 : i32
    %c0_i32_0 = arith.constant 0 : i32
    %c0_i32_1 = arith.constant 0 : i32
    return %c0_i32, %c0_i32_0 : i32, i32
  }
  func.func @transform_4(%arg0: i32) -> (i32, i32) {
    %c0_i32 = arith.constant 0 : i32
    %c0_i32_0 = arith.constant 0 : i32
    %c0_i32_1 = arith.constant 0 : i32
    return %c0_i32, %c0_i32_0 : i32, i32
  }
}

</mosaic_0001>

<llo_original>
// kernel: tpu_custom_call.1
$region0: #{tpu_custom_call.1}
  #allocation0 [shape = 'u32[]', space=smem, size = 0x4, offset = 0x4, fixed_abs, tag = 'smem constant byte address 0x4 - core index']
  #allocation1 [shape = 'u32[72,128]{1,0:T(1,128)}', space=vmem, size = 0x9000, scoped, tag = 'internal scratch']
  #allocation2 [shape = 'f32[1,28]{1,0:T(1,128)}', space=vmem, size = 0x200, scoped, tag = 'scratch operand']
  #allocation3 [shape = 'f32[1,28]{1,0:T(1,128)}', space=vmem, size = 0x200, scoped, tag = 'scratch operand']
  %s0 = inlined_call_operand.vmem [shape: f32[24,784], index: 0, kind: input, shape index: {}]
  %s1 = inlined_call_operand.vmem [shape: f32[784,28], index: 1, kind: input, shape index: {}]
  %s2 = inlined_call_operand.hbm [shape: f32[24,28], index: 2, kind: output, shape index: {0}]
  %s3 = inlined_call_operand.hbm [shape: f32[1,28], index: 3, kind: output, shape index: {1}]
  %s4 = inlined_call_operand.hbm [shape: f32[1,28], index: 4, kind: output, shape index: {2}]
  %5 = xla_tuple %s2, %s3, %s4
  %s6 = sld [smem:[#allocation0]]
  $region61: #{tpu_custom_call.1} parent=0
    _
  %s8 = ssub.s32 1, %s6
  %s9 = scalar_select 0, %s8, %s6
  $region1: #{tpu_custom_call.1} parent=0
    #allocation4 [shape = 'u8[8192]{0}', space=vmem, size = 0x2000, scoped, tag = 'output window, operand 0']
    #allocation5 [shape = 's32[2]{0}', space=sflag, size = 0x8, scoped, tag = 'scoped memory for tpu_custom_call.1']
    #allocation6 [shape = 'u8[512]{0}', space=vmem, size = 0x400, scoped, tag = 'output window, operand 1, single buffered']
    #allocation7 [shape = 's32[1]{0}', space=sflag, size = 0x4, scoped, tag = 'scoped memory for tpu_custom_call.1']
    #allocation8 [shape = 'u8[512]{0}', space=vmem, size = 0x400, scoped, tag = 'output window, operand 2, single buffered']
    %10 = vsyncpa [#allocation5], 0
    %s11 = scalar_lea.sflag [#allocation5], 1
    %12 = vsyncpa %s11, 0
    %13 = vsyncpa [#allocation7], 0
    loop: start=0, step=1, limit=5
    $region2: #{tpu_custom_call.1} parent=1 // loop_pre_header
      _
    $region3: #{tpu_custom_call.1} parent=1 // loop_header
      %s15 = sphi 0, %s19
      %p16 = scmp.ge.s32.totalorder %s15, 5
      %s25 = sphi 0, %s27
      %s28 = sphi 0, %s25
      %s29 = sphi 0, %s28
      %s45 = sphi 0, %s29
      %s49 = sphi 0, %s49
      %s51 = sphi 0, %s49
      %s52 = sphi 0, %s51
      %s66 = sphi 0, %s52
      %s72 = sphi 0, %s74
      %s75 = sphi 0, %s72
      %s76 = sphi 0, %s75
      %s92 = sphi 0, %s76
      %s96 = sphi 0, %s96
      %s98 = sphi 0, %s96
      %s99 = sphi 0, %s98
      %s113 = sphi 0, %s99
      %s117 = sphi 0, %s117
      %s119 = sphi 0, %s117
      %s120 = sphi 0, %s119
      %s134 = sphi 0, %s120
    $region4: #{tpu_custom_call.1} parent=1 // loop_header_branch
      %18 = sbr.rel (%p16) target = $region8
    $region5: #{tpu_custom_call.1} parent=1 // loop_body
      %s20 = ssub.s32 %s15, 1
      %s21 = ssub.s32 %s15, 2
      %s22 = sadd.s32 %s15, 1
      %s23 = ssub.s32 %s15, %s22
      %p24 = scmp.eq.s32.totalorder %s23, 0
      %s26 = sadd.s32 %s25, 1
      %s27 = scalar_select %p24, %s25, %s26
      %p30 = pneg %p24
      %p31 = scmp.eq.s32.totalorder %s15, 2
      %p32 = por %p30, %p31
      %p33 = scmp.ne.s32.totalorder %s25, %s28
      %p34 = scmp.eq.s32.totalorder %s15, 0
      %p35 = por %p33, %p34
      %p36 = scmp.ne.s32.totalorder %s25, %s28
      %p37 = scmp.eq.s32.totalorder %s20, 2
      %p38 = por %p36, %p37
      %p39 = scmp.ne.s32.totalorder %s28, %s29
      %p40 = scmp.eq.s32.totalorder %s20, 0
      %p41 = por %p39, %p40
      %p42 = scmp.ne.s32.totalorder %s28, %s29
      %p43 = scmp.eq.s32.totalorder %s21, 2
      %p44 = por %p42, %p43
      %p46 = scmp.ne.s32.totalorder %s29, %s45
      %p47 = scmp.eq.s32.totalorder %s21, 0
      %p48 = por %p46, %p47
      %s50 = sadd.s32 %s49, 1
      %p53 = scmp.eq.s32.totalorder %s15, 2
      %p54 = scmp.ne.s32.totalorder %s49, %s51
      %p55 = scmp.eq.s32.totalorder %s15, 0
      %p56 = por %p54, %p55
      %p57 = scmp.ne.s32.totalorder %s49, %s51
      %p58 = scmp.eq.s32.totalorder %s20, 2
      %p59 = por %p57, %p58
      %p60 = scmp.ne.s32.totalorder %s51, %s52
      %p61 = scmp.eq.s32.totalorder %s20, 0
      %p62 = por %p60, %p61
      %p63 = scmp.ne.s32.totalorder %s51, %s52
      %p64 = scmp.eq.s32.totalorder %s21, 2
      %p65 = por %p63, %p64
      %p67 = scmp.ne.s32.totalorder %s52, %s66
      %p68 = scmp.eq.s32.totalorder %s21, 0
      %p69 = por %p67, %p68
      %s70 = ssub.s32 %s15, %s22
      %p71 = scmp.eq.s32.totalorder %s70, 0
      %s73 = sadd.s32 %s72, 1
      %s74 = scalar_select %p71, %s72, %s73
      %p77 = pneg %p71
      %p78 = scmp.eq.s32.totalorder %s15, 2
      %p79 = por %p77, %p78
      %p80 = scmp.ne.s32.totalorder %s72, %s75
      %p81 = scmp.eq.s32.totalorder %s15, 0
      %p82 = por %p80, %p81
      %p83 = scmp.ne.s32.totalorder %s72, %s75
      %p84 = scmp.eq.s32.totalorder %s20, 2
      %p85 = por %p83, %p84
      %p86 = scmp.ne.s32.totalorder %s75, %s76
      %p87 = scmp.eq.s32.totalorder %s20, 0
      %p88 = por %p86, %p87
      %p89 = scmp.ne.s32.totalorder %s75, %s76
      %p90 = scmp.eq.s32.totalorder %s21, 2
      %p91 = por %p89, %p90
      %p93 = scmp.ne.s32.totalorder %s76, %s92
      %p94 = scmp.eq.s32.totalorder %s21, 0
      %p95 = por %p93, %p94
      %s97 = sadd.s32 %s96, 1
      %p100 = scmp.eq.s32.totalorder %s15, 2
      %p101 = scmp.ne.s32.totalorder %s96, %s98
      %p102 = scmp.eq.s32.totalorder %s15, 0
      %p103 = por %p101, %p102
      %p104 = scmp.ne.s32.totalorder %s96, %s98
      %p105 = scmp.eq.s32.totalorder %s20, 2
      %p106 = por %p104, %p105
      %p107 = scmp.ne.s32.totalorder %s98, %s99
      %p108 = scmp.eq.s32.totalorder %s20, 0
      %p109 = por %p107, %p108
      %p110 = scmp.ne.s32.totalorder %s98, %s99
      %p111 = scmp.eq.s32.totalorder %s21, 2
      %p112 = por %p110, %p111
      %p114 = scmp.ne.s32.totalorder %s99, %s113
      %p115 = scmp.eq.s32.totalorder %s21, 0
      %p116 = por %p114, %p115
      %s118 = sadd.s32 %s117, 1
      %p121 = scmp.eq.s32.totalorder %s15, 2
      %p122 = scmp.ne.s32.totalorder %s117, %s119
      %p123 = scmp.eq.s32.totalorder %s15, 0
      %p124 = por %p122, %p123
      %p125 = scmp.ne.s32.totalorder %s117, %s119
      %p126 = scmp.eq.s32.totalorder %s20, 2
      %p127 = por %p125, %p126
      %p128 = scmp.ne.s32.totalorder %s119, %s120
      %p129 = scmp.eq.s32.totalorder %s20, 0
      %p130 = por %p128, %p129
      %p131 = scmp.ne.s32.totalorder %s119, %s120
      %p132 = scmp.eq.s32.totalorder %s21, 2
      %p133 = por %p131, %p132
      %p135 = scmp.ne.s32.totalorder %s120, %s134
      %p136 = scmp.eq.s32.totalorder %s21, 0
      %p137 = por %p135, %p136
      %p138 = scmp.le.s32.totalorder 1, %s15
      %p139 = scmp.lt.s32.totalorder %s15, 4
      %p140 = pnand %p138, %p139
      %p141 = pneg %p140
      // Predicated region
      $region9: #{tpu_custom_call.1} parent=5 // pred_check
        _
      $region10: #{tpu_custom_call.1} parent=5 // pred_check_branch
        %143 = sbr.rel (%p140) target = $region12
      $region11: #{tpu_custom_call.1} parent=5 // pred_region
        %s144 = ssub.s32 %s15, 1
        // Predicated region
        $region13: #{tpu_custom_call.1} parent=11 // pred_check
          %p145 = pneg %p62
        $region14: #{tpu_custom_call.1} parent=11 // pred_check_branch
          %147 = sbr.rel (%p145) target = $region16
        $region15: #{tpu_custom_call.1} parent=11 // pred_region
          _
        $region16: #{tpu_custom_call.1} parent=11 // pred_fallthru
          _
      $region12: #{tpu_custom_call.1} parent=5 // pred_fallthru
        _
      %p148 = scmp.lt.s32.totalorder %s15, 3
      // Predicated region
      $region17: #{tpu_custom_call.1} parent=5 // pred_check
        %p149 = pneg %p148
      $region18: #{tpu_custom_call.1} parent=5 // pred_check_branch
        %151 = sbr.rel (%p149) target = $region20
      $region19: #{tpu_custom_call.1} parent=5 // pred_region
        // Predicated region
        $region21: #{tpu_custom_call.1} parent=19 // pred_check
          %p152 = pneg %p35
        $region22: #{tpu_custom_call.1} parent=19 // pred_check_branch
          %154 = sbr.rel (%p152) target = $region24
        $region23: #{tpu_custom_call.1} parent=19 // pred_region
          %p155 = scmp.lt.s32.totalorder %s15, 2
          %s156 = scalar_select %p155, %s15, 2
          %s157 = smul.addr %s156, 7
          %s158 = smul.addr %s157, 8
          %s159 = scalar_lea.vmem %s0, %s158
        $region24: #{tpu_custom_call.1} parent=19 // pred_fallthru
          _
      $region20: #{tpu_custom_call.1} parent=5 // pred_fallthru
        _
      %p160 = scmp.le.s32.totalorder 1, %s15
      %p161 = scmp.lt.s32.totalorder %s15, 4
      %p162 = pnand %p160, %p161
      %p163 = pneg %p162
      // Predicated region
      $region25: #{tpu_custom_call.1} parent=5 // pred_check
        _
      $region26: #{tpu_custom_call.1} parent=5 // pred_check_branch
        %165 = sbr.rel (%p162) target = $region28
      $region27: #{tpu_custom_call.1} parent=5 // pred_region
        %s166 = ssub.s32 %s15, 1
        %p167 = scmp.lt.s32.totalorder %s20, 2
        %s168 = scalar_select %p167, %s20, 2
        %s169 = smul.addr %s168, 7
        %s170 = smul.addr %s169, 8
        %s171 = scalar_lea.vmem %s0, %s170
        %p172 = pneg %p41
        %p173 = pneg %p38
        %p174 = pneg %p62
        %p175 = pneg %p59
        %p176 = pneg %p88
        %p177 = pneg %p85
        %s178 = sand.u32 %s75, 1
        %s179 = scalar_lea.sflag [#allocation5], %s178
        %s180 = sand.u32 %s75, 1
        %s181 = smul.addr %s180, 8
        %s182 = scalar_lea.vmem [#allocation4], %s181
        %p183 = pneg %p109
        %p184 = pneg %p106
        %p185 = pneg %p130
        %p186 = pneg %p127
        %p187 = scmp.lt.s32.totalorder %s20, 2
        %s188 = scalar_select %p187, %s20, 2
        %s189 = smul.addr %s188, 7
        %s190 = smul.addr %s189, 8
        %s191 = scalar_lea.vmem %s0, %s190
        %p192 = scmp.eq.s32.totalorder %s20, 0
        // Predicated region
        $region29: #{tpu_custom_call.1} parent=27 // pred_check
          %p193 = pneg %p192
        $region30: #{tpu_custom_call.1} parent=27 // pred_check_branch
          %195 = sbr.rel (%p193) target = $region32
        $region31: #{tpu_custom_call.1} parent=27 // pred_region
          %vm196 = vcmask 221184
          %197 = vst.msk [vmem:[#allocation2] sm:$0x1] %vm196, 0.0
          %198 = vst.msk [vmem:[#allocation3] sm:$0x1] %vm196, 0.0
        $region32: #{tpu_custom_call.1} parent=27 // pred_fallthru
          _
        %v199 = vld [vmem:[%s191] sm:$0xff]
        %v200 = vld [vmem:[%s191 + $0x8] sm:$0xff]
        %v201 = vld [vmem:[%s191 + $0x10] sm:$0xff]
        %v202 = vld [vmem:[%s191 + $0x18] sm:$0xff]
        %v203 = vld [vmem:[%s191 + $0x20] sm:$0xff]
        %v204 = vld [vmem:[%s191 + $0x28] sm:$0xff]
        %v205 = vld [vmem:[%s191 + $0x30] sm:$0xff]
        %v206 = vld [vmem:[%s1] sm:$0xff]
        %v207 = vld [vmem:[%s1 + $0x8] sm:$0xff]
        %v208 = vld [vmem:[%s1 + $0x10] sm:$0xff]
        %v209 = vld [vmem:[%s1 + $0x18] sm:$0xff]
        %v210 = vld [vmem:[%s1 + $0x20] sm:$0xff]
        %v211 = vld [vmem:[%s1 + $0x28] sm:$0xff]
        %v212 = vld [vmem:[%s1 + $0x30] sm:$0xff]
        %v213 = vld [vmem:[%s1 + $0x38] sm:$0xff]
        %v214 = vld [vmem:[%s1 + $0x40] sm:$0xff]
        %v215 = vld [vmem:[%s1 + $0x48] sm:$0xff]
        %v216 = vld [vmem:[%s1 + $0x50] sm:$0xff]
        %v217 = vld [vmem:[%s1 + $0x58] sm:$0xff]
        %v218 = vld [vmem:[%s1 + $0x60] sm:$0xff]
        %v219 = vld [vmem:[%s1 + $0x68] sm:$0xff]
        %v220 = vld [vmem:[%s1 + $0x70] sm:$0xff]
        %v221 = vld [vmem:[%s1 + $0x78] sm:$0xff]
        %v222 = vld [vmem:[%s1 + $0x80] sm:$0xff]
        %v223 = vld [vmem:[%s1 + $0x88] sm:$0xff]
        %v224 = vld [vmem:[%s1 + $0x90] sm:$0xff]
        %v225 = vld [vmem:[%s1 + $0x98] sm:$0xff]
        %v226 = vld [vmem:[%s1 + $0xa0] sm:$0xff]
        %v227 = vld [vmem:[%s1 + $0xa8] sm:$0xff]
        %v228 = vld [vmem:[%s1 + $0xb0] sm:$0xff]
        %v229 = vld [vmem:[%s1 + $0xb8] sm:$0xff]
        %v230 = vld [vmem:[%s1 + $0xc0] sm:$0xff]
        %v231 = vld [vmem:[%s1 + $0xc8] sm:$0xff]
        %v232 = vld [vmem:[%s1 + $0xd0] sm:$0xff]
        %v233 = vld [vmem:[%s1 + $0xd8] sm:$0xff]
        %v234 = vld [vmem:[%s1 + $0xe0] sm:$0xff]
        %v235 = vld [vmem:[%s1 + $0xe8] sm:$0xff]
        %v236 = vld [vmem:[%s1 + $0xf0] sm:$0xff]
        %v237 = vld [vmem:[%s1 + $0xf8] sm:$0xff]
        %v238 = vld [vmem:[%s1 + $0x100] sm:$0xff]
        %v239 = vld [vmem:[%s1 + $0x108] sm:$0xff]
        %v240 = vld [vmem:[%s1 + $0x110] sm:$0xff]
        %v241 = vld [vmem:[%s1 + $0x118] sm:$0xff]
        %v242 = vld [vmem:[%s1 + $0x120] sm:$0xff]
        %v243 = vld [vmem:[%s1 + $0x128] sm:$0xff]
        %v244 = vld [vmem:[%s1 + $0x130] sm:$0xff]
        %v245 = vld [vmem:[%s1 + $0x138] sm:$0xff]
        %v246 = vld [vmem:[%s1 + $0x140] sm:$0xff]
        %v247 = vld [vmem:[%s1 + $0x148] sm:$0xff]
        %v248 = vld [vmem:[%s1 + $0x150] sm:$0xff]
        %v249 = vld [vmem:[%s1 + $0x158] sm:$0xff]
        %v250 = vld [vmem:[%s1 + $0x160] sm:$0xff]
        %v251 = vld [vmem:[%s1 + $0x168] sm:$0xff]
        %v252 = vld [vmem:[%s1 + $0x170] sm:$0xff]
        %v253 = vld [vmem:[%s1 + $0x178] sm:$0xff]
        %v254 = vld [vmem:[%s1 + $0x180] sm:$0xff]
        %v255 = vld [vmem:[%s1 + $0x188] sm:$0xff]
        %v256 = vld [vmem:[%s1 + $0x190] sm:$0xff]
        %v257 = vld [vmem:[%s1 + $0x198] sm:$0xff]
        %v258 = vld [vmem:[%s1 + $0x1a0] sm:$0xff]
        %v259 = vld [vmem:[%s1 + $0x1a8] sm:$0xff]
        %v260 = vld [vmem:[%s1 + $0x1b0] sm:$0xff]
        %v261 = vld [vmem:[%s1 + $0x1b8] sm:$0xff]
        %v262 = vld [vmem:[%s1 + $0x1c0] sm:$0xff]
        %v263 = vld [vmem:[%s1 + $0x1c8] sm:$0xff]
        %v264 = vld [vmem:[%s1 + $0x1d0] sm:$0xff]
        %v265 = vld [vmem:[%s1 + $0x1d8] sm:$0xff]
        %v266 = vld [vmem:[%s1 + $0x1e0] sm:$0xff]
        %v267 = vld [vmem:[%s1 + $0x1e8] sm:$0xff]
        %v268 = vld [vmem:[%s1 + $0x1f0] sm:$0xff]
        %v269 = vld [vmem:[%s1 + $0x1f8] sm:$0xff]
        %v270 = vld [vmem:[%s1 + $0x200] sm:$0xff]
        %v271 = vld [vmem:[%s1 + $0x208] sm:$0xff]
        %v272 = vld [vmem:[%s1 + $0x210] sm:$0xff]
        %v273 = vld [vmem:[%s1 + $0x218] sm:$0xff]
        %v274 = vld [vmem:[%s1 + $0x220] sm:$0xff]
        %v275 = vld [vmem:[%s1 + $0x228] sm:$0xff]
        %v276 = vld [vmem:[%s1 + $0x230] sm:$0xff]
        %v277 = vld [vmem:[%s1 + $0x238] sm:$0xff]
        %v278 = vld [vmem:[%s1 + $0x240] sm:$0xff]
        %v279 = vld [vmem:[%s1 + $0x248] sm:$0xff]
        %v280 = vld [vmem:[%s1 + $0x250] sm:$0xff]
        %v281 = vld [vmem:[%s1 + $0x258] sm:$0xff]
        %v282 = vld [vmem:[%s1 + $0x260] sm:$0xff]
        %v283 = vld [vmem:[%s1 + $0x268] sm:$0xff]
        %v284 = vld [vmem:[%s1 + $0x270] sm:$0xff]
        %v285 = vld [vmem:[%s1 + $0x278] sm:$0xff]
        %v286 = vld [vmem:[%s1 + $0x280] sm:$0xff]
        %v287 = vld [vmem:[%s1 + $0x288] sm:$0xff]
        %v288 = vld [vmem:[%s1 + $0x290] sm:$0xff]
        %v289 = vld [vmem:[%s1 + $0x298] sm:$0xff]
        %v290 = vld [vmem:[%s1 + $0x2a0] sm:$0xff]
        %v291 = vld [vmem:[%s1 + $0x2a8] sm:$0xff]
        %v292 = vld [vmem:[%s1 + $0x2b0] sm:$0xff]
        %v293 = vld [vmem:[%s1 + $0x2b8] sm:$0xff]
        %v294 = vld [vmem:[%s1 + $0x2c0] sm:$0xff]
        %v295 = vld [vmem:[%s1 + $0x2c8] sm:$0xff]
        %v296 = vld [vmem:[%s1 + $0x2d0] sm:$0xff]
        %v297 = vld [vmem:[%s1 + $0x2d8] sm:$0xff]
        %v298 = vld [vmem:[%s1 + $0x2e0] sm:$0xff]
        %v299 = vld [vmem:[%s1 + $0x2e8] sm:$0xff]
        %v300 = vld [vmem:[%s1 + $0x2f0] sm:$0xff]
        %v301 = vld [vmem:[%s1 + $0x2f8] sm:$0xff]
        %v302 = vld [vmem:[%s1 + $0x300] sm:$0xff]
        %v303 = vld [vmem:[%s1 + $0x308] sm:$0xff]
        %vm304 = vcmask 130048
        %v306 = vsel %vm304, %v205, 0
        %308 = vmatpush.msra.mxu0 %v221
        %309 = vmatpush.msra.mxu0 %v220
        %310 = vmatpush.msra.mxu0 %v219
        %311 = vmatpush.msra.mxu0 %v218
        %312 = vmatpush.msra.mxu0 %v217
        %313 = vmatpush.msra.mxu0 %v216
        %314 = vmatpush.msra.mxu0 %v215
        %315 = vmatpush.msra.mxu0 %v214
        %316 = vmatpush.msra.mxu0 %v213
        %317 = vmatpush.msra.mxu0 %v212
        %318 = vmatpush.msra.mxu0 %v211
        %319 = vmatpush.msra.mxu0 %v210
        %320 = vmatpush.msra.mxu0 %v209
        %321 = vmatpush.msra.mxu0 %v208
        %322 = vmatpush.msra.mxu0 %v207
        %323 = vmatpush.msra.mxu0 %v206
        %324 = vmatmul.f32.gmra.mxu0 %v199
        %v325 = vpop.f32.mrf.mxu0
        %v326 = vadd.f32 0.0, %v325
        %327 = vdwg.mxu0
        %328 = vmatpush.msra.mxu0 %v237
        %329 = vmatpush.msra.mxu0 %v236
        %330 = vmatpush.msra.mxu0 %v235
        %331 = vmatpush.msra.mxu0 %v234
        %332 = vmatpush.msra.mxu0 %v233
        %333 = vmatpush.msra.mxu0 %v232
        %334 = vmatpush.msra.mxu0 %v231
        %335 = vmatpush.msra.mxu0 %v230
        %336 = vmatpush.msra.mxu0 %v229
        %337 = vmatpush.msra.mxu0 %v228
        %338 = vmatpush.msra.mxu0 %v227
        %339 = vmatpush.msra.mxu0 %v226
        %340 = vmatpush.msra.mxu0 %v225
        %341 = vmatpush.msra.mxu0 %v224
        %342 = vmatpush.msra.mxu0 %v223
        %343 = vmatpush.msra.mxu0 %v222
        %344 = vmatmul.f32.gmra.mxu0 %v200
        %v345 = vpop.f32.mrf.mxu0
        %v346 = vadd.f32 %v326, %v345
        %347 = vdwg.mxu0
        %348 = vmatpush.msra.mxu0 %v253
        %349 = vmatpush.msra.mxu0 %v252
        %350 = vmatpush.msra.mxu0 %v251
        %351 = vmatpush.msra.mxu0 %v250
        %352 = vmatpush.msra.mxu0 %v249
        %353 = vmatpush.msra.mxu0 %v248
        %354 = vmatpush.msra.mxu0 %v247
        %355 = vmatpush.msra.mxu0 %v246
        %356 = vmatpush.msra.mxu0 %v245
        %357 = vmatpush.msra.mxu0 %v244
        %358 = vmatpush.msra.mxu0 %v243
        %359 = vmatpush.msra.mxu0 %v242
        %360 = vmatpush.msra.mxu0 %v241
        %361 = vmatpush.msra.mxu0 %v240
        %362 = vmatpush.msra.mxu0 %v239
        %363 = vmatpush.msra.mxu0 %v238
        %364 = vmatmul.f32.gmra.mxu0 %v201
        %v365 = vpop.f32.mrf.mxu0
        %v366 = vadd.f32 %v346, %v365
        %367 = vdwg.mxu0
        %368 = vmatpush.msra.mxu0 %v269
        %369 = vmatpush.msra.mxu0 %v268
        %370 = vmatpush.msra.mxu0 %v267
        %371 = vmatpush.msra.mxu0 %v266
        %372 = vmatpush.msra.mxu0 %v265
        %373 = vmatpush.msra.mxu0 %v264
        %374 = vmatpush.msra.mxu0 %v263
        %375 = vmatpush.msra.mxu0 %v262
        %376 = vmatpush.msra.mxu0 %v261
        %377 = vmatpush.msra.mxu0 %v260
        %378 = vmatpush.msra.mxu0 %v259
        %379 = vmatpush.msra.mxu0 %v258
        %380 = vmatpush.msra.mxu0 %v257
        %381 = vmatpush.msra.mxu0 %v256
        %382 = vmatpush.msra.mxu0 %v255
        %383 = vmatpush.msra.mxu0 %v254
        %384 = vmatmul.f32.gmra.mxu0 %v202
        %v385 = vpop.f32.mrf.mxu0
        %v386 = vadd.f32 %v366, %v385
        %387 = vdwg.mxu0
        %388 = vmatpush.msra.mxu0 %v285
        %389 = vmatpush.msra.mxu0 %v284
        %390 = vmatpush.msra.mxu0 %v283
        %391 = vmatpush.msra.mxu0 %v282
        %392 = vmatpush.msra.mxu0 %v281
        %393 = vmatpush.msra.mxu0 %v280
        %394 = vmatpush.msra.mxu0 %v279
        %395 = vmatpush.msra.mxu0 %v278
        %396 = vmatpush.msra.mxu0 %v277
        %397 = vmatpush.msra.mxu0 %v276
        %398 = vmatpush.msra.mxu0 %v275
        %399 = vmatpush.msra.mxu0 %v274
        %400 = vmatpush.msra.mxu0 %v273
        %401 = vmatpush.msra.mxu0 %v272
        %402 = vmatpush.msra.mxu0 %v271
        %403 = vmatpush.msra.mxu0 %v270
        %404 = vmatmul.f32.gmra.mxu0 %v203
        %v405 = vpop.f32.mrf.mxu0
        %v406 = vadd.f32 %v386, %v405
        %407 = vdwg.mxu0
        %408 = vmatpush.msra.mxu0 %v301
        %409 = vmatpush.msra.mxu0 %v300
        %410 = vmatpush.msra.mxu0 %v299
        %411 = vmatpush.msra.mxu0 %v298
        %412 = vmatpush.msra.mxu0 %v297
        %413 = vmatpush.msra.mxu0 %v296
        %414 = vmatpush.msra.mxu0 %v295
        %415 = vmatpush.msra.mxu0 %v294
        %416 = vmatpush.msra.mxu0 %v293
        %417 = vmatpush.msra.mxu0 %v292
        %418 = vmatpush.msra.mxu0 %v291
        %419 = vmatpush.msra.mxu0 %v290
        %420 = vmatpush.msra.mxu0 %v289
        %421 = vmatpush.msra.mxu0 %v288
        %422 = vmatpush.msra.mxu0 %v287
        %423 = vmatpush.msra.mxu0 %v286
        %424 = vmatmul.f32.gmra.mxu0 %v204
        %v425 = vpop.f32.mrf.mxu0
        %v426 = vadd.f32 %v406, %v425
        %427 = vdwg.mxu0
        %428 = vmatpush.msra.mxu0 0.0
        %429 = vmatpush.msra.mxu0 0.0
        %430 = vmatpush.msra.mxu0 0.0
        %431 = vmatpush.msra.mxu0 0.0
        %432 = vmatpush.msra.mxu0 0.0
        %433 = vmatpush.msra.mxu0 0.0
        %434 = vmatpush.msra.mxu0 0.0
        %435 = vmatpush.msra.mxu0 0.0
        %436 = vmatpush.msra.mxu0 0.0
        %437 = vmatpush.msra.mxu0 0.0
        %438 = vmatpush.msra.mxu0 0.0
        %439 = vmatpush.msra.mxu0 0.0
        %440 = vmatpush.msra.mxu0 0.0
        %441 = vmatpush.msra.mxu0 0.0
        %442 = vmatpush.msra.mxu0 %v303
        %443 = vmatpush.msra.mxu0 %v302
        %444 = vmatmul.f32.gmra.mxu0 %v306
        %v445 = vpop.f32.mrf.mxu0
        %v446 = vadd.f32 %v426, %v445
        %447 = vdwg.mxu0
        %vm448 = vcmask 228352
        %449 = vst.msk [vmem:[%s182] sm:$0xff] %vm448, %v446
        %v450 = vld [vmem:[#allocation2] sm:$0x1]
        %v451 = vsel %vm448, %v446, 0.0
        %v452 = vrot.slane %v451, 4
        %v453 = vadd.f32 %v451, %v452
        %v454 = vrot.slane %v453, 2
        %v455 = vadd.f32 %v453, %v454
        %v456 = vrot.slane %v455, 1
        %v457 = vadd.f32 %v455, %v456
        %v458 = vadd.f32 %v450, %v457
        %vm459 = vcmask 221184
        %460 = vst.msk [vmem:[#allocation2] sm:$0x1] %vm459, %v458
        %v461 = vld [vmem:[#allocation3] sm:$0x1]
        %v462 = vmul.f32 %v446, %v446
        %v463 = vsel %vm448, %v462, 0.0
        %v464 = vrot.slane %v463, 4
        %v465 = vadd.f32 %v463, %v464
        %v466 = vrot.slane %v465, 2
        %v467 = vadd.f32 %v465, %v466
        %v468 = vrot.slane %v467, 1
        %v469 = vadd.f32 %v467, %v468
        %v470 = vadd.f32 %v461, %v469
        %471 = vst.msk [vmem:[#allocation3] sm:$0x1] %vm459, %v470
        %v472 = vld [vmem:[#allocation2] sm:$0x1]
        %473 = vst.msk [vmem:[#allocation6] sm:$0x1] %vm459, %v472
        %v474 = vld [vmem:[#allocation3] sm:$0x1]
        %475 = vst.msk [vmem:[#allocation8] sm:$0x1] %vm459, %v474
        %s476 = sand.u32 %s75, 1
        %s477 = scalar_lea.sflag [#allocation5], %s476
        %s478 = sand.u32 %s75, 1
        %s479 = smul.addr %s478, 8
        %s480 = scalar_lea.vmem [#allocation4], %s479
        // Predicated region
        $region33: #{tpu_custom_call.1} parent=27 // pred_check
          %p481 = pneg %p85
        $region34: #{tpu_custom_call.1} parent=27 // pred_check_branch
          %483 = sbr.rel (%p481) target = $region36
        $region35: #{tpu_custom_call.1} parent=27 // pred_region
          %485 = vsyncadd %s477, 0
          %s486 = smul.addr %s20, 8
          %s487 = scalar_lea.hbm %s2, %s486
          %s489 = sshll.u32 %s480, 4
          %s490 = int_to_ptr.vmem [resolvable:$true] %s489
          %s491 = sshll.u32 %s487, 4
          %s492 = int_to_ptr.hbm [resolvable:$true] %s491
          %494 = dma.vmem_to_hbm [thread:$0]  %s490, 128, %s492, %s477
        $region36: #{tpu_custom_call.1} parent=27 // pred_fallthru
          _
        // Predicated region
        $region37: #{tpu_custom_call.1} parent=27 // pred_check
          %p495 = pneg %p106
        $region38: #{tpu_custom_call.1} parent=27 // pred_check_branch
          %497 = sbr.rel (%p495) target = $region40
        $region39: #{tpu_custom_call.1} parent=27 // pred_region
          %499 = vsyncadd [#allocation7], 0
          %s501 = sshll.u32 [#allocation6], 4
          %s502 = int_to_ptr.vmem [resolvable:$true] %s501
          %s503 = sshll.u32 %s3, 4
          %s504 = int_to_ptr.hbm [resolvable:$true] %s503
          %506 = dma.vmem_to_hbm [thread:$0]  %s502, 16, %s504, [#allocation7]
        $region40: #{tpu_custom_call.1} parent=27 // pred_fallthru
          _
        // Predicated region
        $region41: #{tpu_custom_call.1} parent=27 // pred_check
          %p507 = pneg %p127
        $region42: #{tpu_custom_call.1} parent=27 // pred_check_branch
          %509 = sbr.rel (%p507) target = $region44
        $region43: #{tpu_custom_call.1} parent=27 // pred_region
          %511 = vsyncadd [#allocation7], 0
          %s513 = sshll.u32 [#allocation8], 4
          %s514 = int_to_ptr.vmem [resolvable:$true] %s513
          %s515 = sshll.u32 %s4, 4
          %s516 = int_to_ptr.hbm [resolvable:$true] %s515
          %518 = dma.vmem_to_hbm [thread:$0]  %s514, 16, %s516, [#allocation7]
        $region44: #{tpu_custom_call.1} parent=27 // pred_fallthru
          _
        // Predicated region
        $region45: #{tpu_custom_call.1} parent=27 // pred_check
          %p519 = pneg %p106
        $region46: #{tpu_custom_call.1} parent=27 // pred_check_branch
          %521 = sbr.rel (%p519) target = $region48
        $region47: #{tpu_custom_call.1} parent=27 // pred_region
          %523 = dma.done [#allocation7], 16
        $region48: #{tpu_custom_call.1} parent=27 // pred_fallthru
          _
        // Predicated region
        $region49: #{tpu_custom_call.1} parent=27 // pred_check
          %p524 = pneg %p127
        $region50: #{tpu_custom_call.1} parent=27 // pred_check_branch
          %526 = sbr.rel (%p524) target = $region52
        $region51: #{tpu_custom_call.1} parent=27 // pred_region
          %528 = dma.done [#allocation7], 16
        $region52: #{tpu_custom_call.1} parent=27 // pred_fallthru
          _
      $region28: #{tpu_custom_call.1} parent=5 // pred_fallthru
        _
      %p529 = scmp.le.s32.totalorder 2, %s15
      // Predicated region
      $region53: #{tpu_custom_call.1} parent=5 // pred_check
        %p530 = pneg %p529
      $region54: #{tpu_custom_call.1} parent=5 // pred_check_branch
        %532 = sbr.rel (%p530) target = $region56
      $region55: #{tpu_custom_call.1} parent=5 // pred_region
        %s533 = ssub.s32 %s15, 2
        // Predicated region
        $region57: #{tpu_custom_call.1} parent=55 // pred_check
          %p534 = pneg %p91
        $region58: #{tpu_custom_call.1} parent=55 // pred_check_branch
          %536 = sbr.rel (%p534) target = $region60
        $region59: #{tpu_custom_call.1} parent=55 // pred_region
          %s537 = sand.u32 %s76, 1
          %s538 = scalar_lea.sflag [#allocation5], %s537
          %s539 = sand.u32 %s76, 1
          %s540 = smul.addr %s539, 8
          %s541 = scalar_lea.vmem [#allocation4], %s540
          %543 = dma.done %s538, 128
        $region60: #{tpu_custom_call.1} parent=55 // pred_fallthru
          _
      $region56: #{tpu_custom_call.1} parent=5 // pred_fallthru
        _
    $region6: #{tpu_custom_call.1} parent=1 // loop_footer
      %s19 = sadd.s32 1, %s15
    $region7: #{tpu_custom_call.1} parent=1 // loop_footer_branch
      %14 = sbr.rel target = $region3
    $region8: #{tpu_custom_call.1} parent=1 // loop_exit
      _
    %544 = vsyncpa [#allocation5], 1
    %s545 = scalar_lea.sflag [#allocation5], 1
    %546 = vsyncpa %s545, 1
    %547 = vsyncpa [#allocation7], 1

</llo_original>
